<compile_context>
chip_gen: v6e
topology: v6e:2x2x1
jax: 0.10.0
libtpu: 0.0.40
codegen_flags: <defaults>
</compile_context>

<pallas_src>
import jax
import jax.numpy as jnp
from jax.experimental import pallas as pl
from jax.experimental.pallas import tpu as pltpu

# ----------------------------- model config (small) -----------------------------
VOCAB_SIZE = 50
EMB_DIM = 32          # D
N_FILTERS = 8         # NF
FILTER_SIZES = (3, 4, 5)
OUTPUT_DIM = 4        # O
PAD_IDX = 0
SEQ_LEN = 16          # S
BATCH = 2             # B
DROPOUT_P = 0.5       # inference -> identity

N_CONV_COLS = sum(FILTER_SIZES) * N_FILTERS   # 96
CONV_PAD = 128                                # lane-dense N for the fused conv matmul
OUT_PAD = 128                                 # lane-dense N for the FC matmul / store


def make_cnn_kernel(B, S, D, NF, filter_sizes, conv_pad):
    def kernel(emb_ref, wconv_ref, bconv_ref, wfc_ref, bfc_ref, out_ref):
        # --- one lane-dense MXU matmul over the whole (B*S, D) slab ---
        x = emb_ref[...]                                                  # (B*S, D)
        y = jnp.dot(x, wconv_ref[...], preferred_element_type=jnp.float32)  # (B*S, conv_pad)
        y = y.reshape(B, S, conv_pad)

        bconv = bconv_ref[...]                                            # (1, n_fs*NF)

        pooled = []
        off = 0
        for i, fs in enumerate(filter_sizes):
            L = S - fs + 1
            # shift-0 slice initializes the accumulator (no zeros + add)
            acc = y[:, 0:L, off:off + NF]                                 # (B, L, NF)
            for s in range(1, fs):
                acc = acc + y[:, s:s + L, off + s * NF:off + (s + 1) * NF]
            # max-pool over time first; bias + ReLU commute with the max
            pooled_pre = jnp.max(acc, axis=1)                             # (B, NF)
            pooled.append(
                jnp.maximum(pooled_pre + bconv[:, i * NF:(i + 1) * NF], 0.0))
            off += fs * NF

        cat = jnp.concatenate(pooled, axis=1)                             # (B, n_fs*NF)
        # single fused FC matmul, lane-dense (B, 128) store
        out_ref[...] = (jnp.dot(cat, wfc_ref[...],
                                preferred_element_type=jnp.float32)
                        + bfc_ref[...])

    return kernel


def cnn_forward(text, params):
    """text: (seq_len, batch) int32. Returns (batch, output_dim) float32."""
    emb_table = params["embedding"]           # (V, D)
    conv_ws = params["conv_w"]                # list of (fs, D, NF)
    conv_bs = params["conv_b"]                # list of (1, NF)
    w_fc = params["fc_w"]                     # (n_fs*NF, O)
    b_fc = params["fc_b"]                     # (1, O)

    # --- glue (plain JAX): permute + embedding gather ---
    tokens = text.T                                                        # (B, S)
    embeds = jnp.take(emb_table, tokens, axis=0).astype(jnp.float32)       # (B, S, D)
    B, S, D = embeds.shape
    NF = conv_ws[0].shape[-1]
    O = w_fc.shape[-1]

    # Fuse every (filter, shift) weight slice into one lane-dense (D, 128) matrix.
    w_fused = jnp.concatenate(
        [w[s] for w in conv_ws for s in range(w.shape[0])], axis=-1)       # (D, 96)
    w_fused = jnp.pad(w_fused, ((0, 0), (0, CONV_PAD - w_fused.shape[-1])))

    b_conv = jnp.concatenate(conv_bs, axis=-1)                             # (1, n_fs*NF)

    # Pad FC weight/bias so the output store is lane-dense (B, 128).
    w_fc_pad = jnp.pad(w_fc, ((0, 0), (0, OUT_PAD - O)))                   # (n_fs*NF, 128)
    b_fc_pad = jnp.pad(b_fc, ((0, 0), (0, OUT_PAD - O)))                   # (1, 128)

    embeds_flat = embeds.reshape(B * S, D)                                 # (B*S, D)

    kernel = make_cnn_kernel(B, S, D, NF, FILTER_SIZES, CONV_PAD)
    vmem = pl.BlockSpec(memory_space=pltpu.MemorySpace.VMEM)
    out_pad = pl.pallas_call(
        kernel,
        out_shape=jax.ShapeDtypeStruct((B, OUT_PAD), jnp.float32),
        in_specs=[vmem] * 5,
        out_specs=vmem,
    )(embeds_flat, w_fused, b_conv, w_fc_pad, b_fc_pad)

    # dropout is identity at inference; slice away the lane padding
    return out_pad[:, :O]


def init_params(key):
    keys = jax.random.split(key, 3 + 2 * len(FILTER_SIZES))
    emb = 0.1 * jax.random.normal(keys[0], (VOCAB_SIZE, EMB_DIM), jnp.float32)
    emb = emb.at[PAD_IDX].set(0.0)            # padding_idx row zeroed (nn.Embedding semantics)

    conv_w, conv_b = [], []
    for i, fs in enumerate(FILTER_SIZES):
        # PyTorch Conv2d weight (NF, 1, fs, D) stored here permuted to (fs, D, NF)
        w = 0.1 * jax.random.normal(keys[1 + 2 * i], (fs, EMB_DIM, N_FILTERS), jnp.float32)
        b = 0.1 * jax.random.normal(keys[2 + 2 * i], (1, N_FILTERS), jnp.float32)
        conv_w.append(w)
        conv_b.append(b)

    w_fc = 0.1 * jax.random.normal(keys[-2], (len(FILTER_SIZES) * N_FILTERS, OUTPUT_DIM),
                                   jnp.float32)
    b_fc = 0.1 * jax.random.normal(keys[-1], (1, OUTPUT_DIM), jnp.float32)
    return {"embedding": emb, "conv_w": conv_w, "conv_b": conv_b,
            "fc_w": w_fc, "fc_b": b_fc}


def reference_forward(text, params):
    """Pure-JAX reference with identical semantics (sanity check)."""
    tokens = text.T
    emb = jnp.take(params["embedding"], tokens, axis=0)   # (B, S, D)
    pooled = []
    for fs, w, bb in zip(FILTER_SIZES, params["conv_w"], params["conv_b"]):
        L = emb.shape[1] - fs + 1
        windows = jnp.stack([emb[:, s:s + L, :] for s in range(fs)], axis=2)  # (B, L, fs, D)
        conv = jnp.einsum("blfd,fdn->bln", windows, w) + bb[0]                # (B, L, NF)
        conv = jax.nn.relu(conv)
        pooled.append(conv.max(axis=1))                                       # (B, NF)
    cat = jnp.concatenate(pooled, axis=1)
    return cat @ params["fc_w"] + params["fc_b"][0]


if __name__ == "__main__":
    key = jax.random.PRNGKey(0)
    k_params, k_text = jax.random.split(key)
    params = init_params(k_params)
    text = jax.random.randint(k_text, (SEQ_LEN, BATCH), 0, VOCAB_SIZE, dtype=jnp.int32)

    out = cnn_forward(text, params)
    out = jax.block_until_ready(out)

    ref = jax.block_until_ready(reference_forward(text, params))
    assert out.shape == (BATCH, OUTPUT_DIM)
    assert jnp.allclose(out, ref, atol=1e-4, rtol=1e-4), (out, ref)
    print("KERNEL_OK")
</pallas_src>

<mosaic_0001>
module attributes {stable_mosaic.version = 11 : i64} {
  func.func @kernel(%arg0: memref<32x32xf32, #tpu.memory_space<vmem>>, %arg1: memref<32x128xf32, #tpu.memory_space<vmem>>, %arg2: memref<1x24xf32, #tpu.memory_space<vmem>>, %arg3: memref<24x128xf32, #tpu.memory_space<vmem>>, %arg4: memref<1x128xf32, #tpu.memory_space<vmem>>, %arg5: memref<2x128xf32, #tpu.memory_space<vmem>>) attributes {dimension_semantics = [], scalar_prefetch = 0 : i64, scratch_operands = 0 : i64, tpu.core_type = #tpu.core_type<tc>} {
    %c0 = arith.constant 0 : index
    %c0_0 = arith.constant 0 : index
    %0 = vector.load %arg0[%c0, %c0_0] : memref<32x32xf32, #tpu.memory_space<vmem>>, vector<32x32xf32>
    %c0_1 = arith.constant 0 : index
    %c0_2 = arith.constant 0 : index
    %1 = vector.load %arg1[%c0_1, %c0_2] : memref<32x128xf32, #tpu.memory_space<vmem>>, vector<32x128xf32>
    %cst = arith.constant dense<0.000000e+00> : vector<32x128xf32>
    %2 = tpu.matmul %0, %1, %cst {dimension_numbers = #tpu.dot_dimension_numbers<[1], [0], [0], [1], [0, 0, 1, 1], [], []>} : vector<32x32xf32>, vector<32x128xf32>, vector<32x128xf32> -> vector<32x128xf32>
    %3 = vector.shape_cast %2 : vector<32x128xf32> to vector<2x16x128xf32>
    %c0_3 = arith.constant 0 : index
    %c0_4 = arith.constant 0 : index
    %4 = vector.load %arg2[%c0_3, %c0_4] : memref<1x24xf32, #tpu.memory_space<vmem>>, vector<1x24xf32>
    %5 = vector.extract_strided_slice %3 {offsets = [0, 0, 0], sizes = [2, 14, 8], strides = [1, 1, 1]} : vector<2x16x128xf32> to vector<2x14x8xf32>
    %6 = vector.extract_strided_slice %3 {offsets = [0, 1, 8], sizes = [2, 14, 8], strides = [1, 1, 1]} : vector<2x16x128xf32> to vector<2x14x8xf32>
    %7 = arith.addf %5, %6 : vector<2x14x8xf32>
    %8 = vector.extract_strided_slice %3 {offsets = [0, 2, 16], sizes = [2, 14, 8], strides = [1, 1, 1]} : vector<2x16x128xf32> to vector<2x14x8xf32>
    %9 = arith.addf %7, %8 : vector<2x14x8xf32>
    %cst_5 = arith.constant dense<0xFF800000> : vector<2x8xf32>
    %10 = vector.multi_reduction <maximumf>, %9, %cst_5 [1] : vector<2x14x8xf32> to vector<2x8xf32>
    %11 = vector.extract_strided_slice %4 {offsets = [0, 0], sizes = [1, 8], strides = [1, 1]} : vector<1x24xf32> to vector<1x8xf32>
    %12 = vector.broadcast %11 : vector<1x8xf32> to vector<2x8xf32>
    %13 = arith.addf %10, %12 : vector<2x8xf32>
    %cst_6 = arith.constant 0.000000e+00 : f32
    %14 = vector.broadcast %cst_6 : f32 to vector<2x8xf32>
    %15 = arith.maximumf %13, %14 : vector<2x8xf32>
    %16 = vector.extract_strided_slice %3 {offsets = [0, 0, 24], sizes = [2, 13, 8], strides = [1, 1, 1]} : vector<2x16x128xf32> to vector<2x13x8xf32>
    %17 = vector.extract_strided_slice %3 {offsets = [0, 1, 32], sizes = [2, 13, 8], strides = [1, 1, 1]} : vector<2x16x128xf32> to vector<2x13x8xf32>
    %18 = arith.addf %16, %17 : vector<2x13x8xf32>
    %19 = vector.extract_strided_slice %3 {offsets = [0, 2, 40], sizes = [2, 13, 8], strides = [1, 1, 1]} : vector<2x16x128xf32> to vector<2x13x8xf32>
    %20 = arith.addf %18, %19 : vector<2x13x8xf32>
    %21 = vector.extract_strided_slice %3 {offsets = [0, 3, 48], sizes = [2, 13, 8], strides = [1, 1, 1]} : vector<2x16x128xf32> to vector<2x13x8xf32>
    %22 = arith.addf %20, %21 : vector<2x13x8xf32>
    %cst_7 = arith.constant dense<0xFF800000> : vector<2x8xf32>
    %23 = vector.multi_reduction <maximumf>, %22, %cst_7 [1] : vector<2x13x8xf32> to vector<2x8xf32>
    %24 = vector.extract_strided_slice %4 {offsets = [0, 8], sizes = [1, 8], strides = [1, 1]} : vector<1x24xf32> to vector<1x8xf32>
    %25 = vector.broadcast %24 : vector<1x8xf32> to vector<2x8xf32>
    %26 = arith.addf %23, %25 : vector<2x8xf32>
    %cst_8 = arith.constant 0.000000e+00 : f32
    %27 = vector.broadcast %cst_8 : f32 to vector<2x8xf32>
    %28 = arith.maximumf %26, %27 : vector<2x8xf32>
    %29 = vector.extract_strided_slice %3 {offsets = [0, 0, 56], sizes = [2, 12, 8], strides = [1, 1, 1]} : vector<2x16x128xf32> to vector<2x12x8xf32>
    %30 = vector.extract_strided_slice %3 {offsets = [0, 1, 64], sizes = [2, 12, 8], strides = [1, 1, 1]} : vector<2x16x128xf32> to vector<2x12x8xf32>
    %31 = arith.addf %29, %30 : vector<2x12x8xf32>
    %32 = vector.extract_strided_slice %3 {offsets = [0, 2, 72], sizes = [2, 12, 8], strides = [1, 1, 1]} : vector<2x16x128xf32> to vector<2x12x8xf32>
    %33 = arith.addf %31, %32 : vector<2x12x8xf32>
    %34 = vector.extract_strided_slice %3 {offsets = [0, 3, 80], sizes = [2, 12, 8], strides = [1, 1, 1]} : vector<2x16x128xf32> to vector<2x12x8xf32>
    %35 = arith.addf %33, %34 : vector<2x12x8xf32>
    %36 = vector.extract_strided_slice %3 {offsets = [0, 4, 88], sizes = [2, 12, 8], strides = [1, 1, 1]} : vector<2x16x128xf32> to vector<2x12x8xf32>
    %37 = arith.addf %35, %36 : vector<2x12x8xf32>
    %cst_9 = arith.constant dense<0xFF800000> : vector<2x8xf32>
    %38 = vector.multi_reduction <maximumf>, %37, %cst_9 [1] : vector<2x12x8xf32> to vector<2x8xf32>
    %39 = vector.extract_strided_slice %4 {offsets = [0, 16], sizes = [1, 8], strides = [1, 1]} : vector<1x24xf32> to vector<1x8xf32>
    %40 = vector.broadcast %39 : vector<1x8xf32> to vector<2x8xf32>
    %41 = arith.addf %38, %40 : vector<2x8xf32>
    %cst_10 = arith.constant 0.000000e+00 : f32
    %42 = vector.broadcast %cst_10 : f32 to vector<2x8xf32>
    %43 = arith.maximumf %41, %42 : vector<2x8xf32>
    %44 = tpu.concatenate %15, %28, %43 in 1 : vector<2x8xf32>, vector<2x8xf32>, vector<2x8xf32> -> vector<2x24xf32>
    %c0_11 = arith.constant 0 : index
    %c0_12 = arith.constant 0 : index
    %45 = vector.load %arg3[%c0_11, %c0_12] : memref<24x128xf32, #tpu.memory_space<vmem>>, vector<24x128xf32>
    %cst_13 = arith.constant dense<0.000000e+00> : vector<2x128xf32>
    %46 = tpu.matmul %44, %45, %cst_13 {dimension_numbers = #tpu.dot_dimension_numbers<[1], [0], [0], [1], [0, 0, 1, 1], [], []>} : vector<2x24xf32>, vector<24x128xf32>, vector<2x128xf32> -> vector<2x128xf32>
    %c0_14 = arith.constant 0 : index
    %c0_15 = arith.constant 0 : index
    %47 = vector.load %arg4[%c0_14, %c0_15] : memref<1x128xf32, #tpu.memory_space<vmem>>, vector<1x128xf32>
    %48 = vector.broadcast %47 : vector<1x128xf32> to vector<2x128xf32>
    %49 = arith.addf %46, %48 : vector<2x128xf32>
    %c0_16 = arith.constant 0 : index
    %c0_17 = arith.constant 0 : index
    %50 = vector.load %arg5[%c0_16, %c0_17] : memref<2x128xf32, #tpu.memory_space<vmem>>, vector<2x128xf32>
    tpu.vector_store %arg5[%c0_16, %c0_17], %49 {strides = array<i32>} : memref<2x128xf32, #tpu.memory_space<vmem>>, vector<2x128xf32>,
    return
  }
}

</mosaic_0001>

<llo_original>
// kernel: tpu_custom_call.1
$region0: #{tpu_custom_call.1}
  #allocation0 [shape = 'u32[]', space=smem, size = 0x4, offset = 0x4, fixed_abs, tag = 'smem constant byte address 0x4 - core index']
  #allocation1 [shape = 'u32[144,128]{1,0:T(1,128)}', space=vmem, size = 0x12000, scoped, tag = 'internal scratch']
  %s0 = inlined_call_operand.hbm [shape: f32[32,32], index: 0, kind: input, shape index: {}]
  %s1 = inlined_call_operand.hbm [shape: f32[32,128], index: 1, kind: input, shape index: {}]
  %s2 = inlined_call_operand.vmem [shape: f32[1,24], index: 2, kind: input, shape index: {}]
  %s3 = inlined_call_operand.hbm [shape: f32[24,128], index: 3, kind: input, shape index: {}]
  %s4 = inlined_call_operand.vmem [shape: f32[1,128], index: 4, kind: input, shape index: {}]
  %s5 = inlined_call_operand.hbm [shape: f32[2,128], index: 5, kind: output, shape index: {}]
  %s6 = sld [smem:[#allocation0]]
  $region42: #{tpu_custom_call.1} parent=0
    _
  %s8 = ssub.s32 1, %s6
  %s9 = scalar_select 0, %s8, %s6
  $region1: #{tpu_custom_call.1} parent=0
    #allocation2 [shape = 'u8[16384]{0}', space=vmem, size = 0x4000, scoped, tag = 'input window, operand 0, single buffered']
    #allocation3 [shape = 's32[1]{0}', space=sflag, size = 0x4, scoped, tag = 'scoped memory for tpu_custom_call.1']
    #allocation4 [shape = 's32[1]{0}', space=sflag, size = 0x4, scoped, tag = 'scoped memory for tpu_custom_call.1']
    #allocation5 [shape = 'u8[16384]{0}', space=vmem, size = 0x4000, scoped, tag = 'input window, operand 1, single buffered']
    #allocation6 [shape = 's32[1]{0}', space=sflag, size = 0x4, scoped, tag = 'scoped memory for tpu_custom_call.1']
    #allocation7 [shape = 'u8[12288]{0}', space=vmem, size = 0x3000, scoped, tag = 'input window, operand 3, single buffered']
    #allocation8 [shape = 'u8[1024]{0}', space=vmem, size = 0x400, scoped, tag = 'output window, operand 0, single buffered']
    %10 = vsyncpa [#allocation3], 0
    %11 = vsyncpa [#allocation6], 0
    %12 = vsyncpa [#allocation4], 0
    // Predicated region
    $region2: #{tpu_custom_call.1} parent=1 // pred_check
      _
    $region3: #{tpu_custom_call.1} parent=1 // pred_check_branch
      %14 = sbr.rel (0) target = $region5
    $region4: #{tpu_custom_call.1} parent=1 // pred_region
      %s16 = ssub.s32 512, 512
      %17 = vsyncadd [#allocation3], %s16
      %s18 = sshll.u32 [#allocation2], 4
      %s19 = int_to_ptr.vmem [resolvable:$true] %s18
      %24 = dma.hbm_to_vmem [thread:$0]  %s0, 512, %s19, [#allocation3], 128, 128, 8
    $region5: #{tpu_custom_call.1} parent=1 // pred_fallthru
      _
    // Predicated region
    $region6: #{tpu_custom_call.1} parent=1 // pred_check
      _
    $region7: #{tpu_custom_call.1} parent=1 // pred_check_branch
      %26 = sbr.rel (0) target = $region9
    $region8: #{tpu_custom_call.1} parent=1 // pred_region
      %s28 = ssub.s32 512, 512
      %29 = vsyncadd [#allocation6], %s28
      %s30 = sshll.u32 [#allocation5], 4
      %s31 = int_to_ptr.vmem [resolvable:$true] %s30
      %36 = dma.hbm_to_vmem [thread:$0]  %s1, 512, %s31, [#allocation6], 128, 128, 8
    $region9: #{tpu_custom_call.1} parent=1 // pred_fallthru
      _
    // Predicated region
    $region10: #{tpu_custom_call.1} parent=1 // pred_check
      _
    $region11: #{tpu_custom_call.1} parent=1 // pred_check_branch
      %38 = sbr.rel (0) target = $region13
    $region12: #{tpu_custom_call.1} parent=1 // pred_region
      _
    $region13: #{tpu_custom_call.1} parent=1 // pred_fallthru
      _
    // Predicated region
    $region14: #{tpu_custom_call.1} parent=1 // pred_check
      _
    $region15: #{tpu_custom_call.1} parent=1 // pred_check_branch
      %40 = sbr.rel (0) target = $region17
    $region16: #{tpu_custom_call.1} parent=1 // pred_region
      %s42 = ssub.s32 384, 384
      %43 = vsyncadd [#allocation6], %s42
      %s44 = sshll.u32 [#allocation7], 4
      %s45 = int_to_ptr.vmem [resolvable:$true] %s44
      %50 = dma.hbm_to_vmem [thread:$0]  %s3, 384, %s45, [#allocation6], 128, 128, 8
    $region17: #{tpu_custom_call.1} parent=1 // pred_fallthru
      _
    // Predicated region
    $region18: #{tpu_custom_call.1} parent=1 // pred_check
      _
    $region19: #{tpu_custom_call.1} parent=1 // pred_check_branch
      %52 = sbr.rel (0) target = $region21
    $region20: #{tpu_custom_call.1} parent=1 // pred_region
      _
    $region21: #{tpu_custom_call.1} parent=1 // pred_fallthru
      _
    // Predicated region
    $region22: #{tpu_custom_call.1} parent=1 // pred_check
      _
    $region23: #{tpu_custom_call.1} parent=1 // pred_check_branch
      %54 = sbr.rel (0) target = $region25
    $region24: #{tpu_custom_call.1} parent=1 // pred_region
      %55 = dma.done [#allocation3], 512
    $region25: #{tpu_custom_call.1} parent=1 // pred_fallthru
      _
    // Predicated region
    $region26: #{tpu_custom_call.1} parent=1 // pred_check
      _
    $region27: #{tpu_custom_call.1} parent=1 // pred_check_branch
      %57 = sbr.rel (0) target = $region29
    $region28: #{tpu_custom_call.1} parent=1 // pred_region
      %58 = dma.done [#allocation6], 512
    $region29: #{tpu_custom_call.1} parent=1 // pred_fallthru
      _
    // Predicated region
    $region30: #{tpu_custom_call.1} parent=1 // pred_check
      _
    $region31: #{tpu_custom_call.1} parent=1 // pred_check_branch
      %60 = sbr.rel (0) target = $region33
    $region32: #{tpu_custom_call.1} parent=1 // pred_region
      %61 = dma.done [#allocation6], 384
    $region33: #{tpu_custom_call.1} parent=1 // pred_fallthru
      _
    %v62 = vld [vmem:[#allocation2] sm:$0xff]
    %v63 = vld [vmem:[#allocation2 + $0x8] sm:$0xff]
    %v64 = vld [vmem:[#allocation2 + $0x10] sm:$0xff]
    %v65 = vld [vmem:[#allocation2 + $0x18] sm:$0xff]
    %v66 = vld [vmem:[#allocation5] sm:$0xff]
    %v67 = vld [vmem:[#allocation5 + $0x8] sm:$0xff]
    %v68 = vld [vmem:[#allocation5 + $0x10] sm:$0xff]
    %v69 = vld [vmem:[#allocation5 + $0x18] sm:$0xff]
    %vm70 = vcmask 261120
    %v72 = vsel %vm70, %v62, 0
    %v75 = vsel %vm70, %v63, 0
    %v78 = vsel %vm70, %v64, 0
    %v81 = vsel %vm70, %v65, 0
    %83 = vmatprep.subr.mxu0 0.0
    %84 = vmatpush1.msra.mxu0 0.0
    %85 = vmatprep.subr.mxu0 0.0
    %86 = vmatpush1.msra.mxu0 0.0
    %87 = vmatprep.subr.mxu0 0.0
    %88 = vmatpush1.msra.mxu0 0.0
    %89 = vmatprep.subr.mxu0 0.0
    %90 = vmatpush1.msra.mxu0 0.0
    %91 = vmatprep.subr.mxu0 0.0
    %92 = vmatpush1.msra.mxu0 0.0
    %93 = vmatprep.subr.mxu0 0.0
    %94 = vmatpush1.msra.mxu0 0.0
    %95 = vmatprep.subr.mxu0 0.0
    %96 = vmatpush1.msra.mxu0 0.0
    %97 = vmatprep.subr.mxu0 0.0
    %98 = vmatpush1.msra.mxu0 0.0
    %99 = vmatprep.subr.mxu0 0.0
    %100 = vmatpush1.msra.mxu0 0.0
    %101 = vmatprep.subr.mxu0 0.0
    %102 = vmatpush1.msra.mxu0 0.0
    %103 = vmatprep.subr.mxu0 0.0
    %104 = vmatpush1.msra.mxu0 0.0
    %105 = vmatprep.subr.mxu0 0.0
    %106 = vmatpush1.msra.mxu0 0.0
    %107 = vmatprep.subr.mxu0 0.0
    %108 = vmatpush1.msra.mxu0 %v69
    %109 = vmatprep.subr.mxu0 0.0
    %110 = vmatpush1.msra.mxu0 %v68
    %111 = vmatprep.subr.mxu0 0.0
    %112 = vmatpush1.msra.mxu0 %v67
    %113 = vmatprep.subr.mxu0 0.0
    %114 = vmatpush1.msra.mxu0 %v66
    %115 = vmatprep.subr.mxu0 0.0
    %116 = vmatpush2.msra.mxu0 0.0
    %117 = vmatprep.subr.mxu0 0.0
    %118 = vmatpush2.msra.mxu0 0.0
    %119 = vmatprep.subr.mxu0 0.0
    %120 = vmatpush2.msra.mxu0 0.0
    %121 = vmatprep.subr.mxu0 0.0
    %122 = vmatpush2.msra.mxu0 0.0
    %123 = vmatprep.subr.mxu0 0.0
    %124 = vmatpush2.msra.mxu0 0.0
    %125 = vmatprep.subr.mxu0 0.0
    %126 = vmatpush2.msra.mxu0 0.0
    %127 = vmatprep.subr.mxu0 0.0
    %128 = vmatpush2.msra.mxu0 0.0
    %129 = vmatprep.subr.mxu0 0.0
    %130 = vmatpush2.msra.mxu0 0.0
    %131 = vmatprep.subr.mxu0 0.0
    %132 = vmatpush2.msra.mxu0 0.0
    %133 = vmatprep.subr.mxu0 0.0
    %134 = vmatpush2.msra.mxu0 0.0
    %135 = vmatprep.subr.mxu0 0.0
    %136 = vmatpush2.msra.mxu0 0.0
    %137 = vmatprep.subr.mxu0 0.0
    %138 = vmatpush2.msra.mxu0 0.0
    %139 = vmatprep.subr.mxu0 0.0
    %140 = vmatpush2.msra.mxu0 0.0
    %141 = vmatprep.subr.mxu0 0.0
    %142 = vmatpush2.msra.mxu0 0.0
    %143 = vmatprep.subr.mxu0 0.0
    %144 = vmatpush2.msra.mxu0 0.0
    %145 = vmatprep.subr.mxu0 0.0
    %146 = vmatpush2.msra.mxu0 0.0
    %147 = vmatprep.mubr.f32.mxu0 0.0
    %148 = vmatmul.mubr.f32.gmra.mxu0 %v72
    %v149 = vpop.f32.mrf.mxu0
    %v150 = vadd.f32 0.0, %v149
    %v151 = vpop.f32.mrf.mxu0
    %152 = vmatprep.mubr.f32.mxu0 0.0
    %153 = vmatmul.mubr.f32.gmra.mxu0 %v75
    %v154 = vpop.f32.mrf.mxu0
    %v155 = vadd.f32 0.0, %v154
    %v156 = vpop.f32.mrf.mxu0
    %157 = vmatprep.mubr.f32.mxu0 0.0
    %158 = vmatmul.mubr.f32.gmra.mxu0 %v78
    %v159 = vpop.f32.mrf.mxu0
    %v160 = vadd.f32 0.0, %v159
    %v161 = vpop.f32.mrf.mxu0
    %162 = vmatprep.mubr.f32.mxu0 0.0
    %163 = vmatmul.mubr.f32.gmra.mxu0 %v81
    %v164 = vpop.f32.mrf.mxu0
    %v165 = vadd.f32 0.0, %v164
    %v166 = vpop.f32.mrf.mxu0
    %167 = vdwg.mxu0
    %v168 = vld [vmem:[%s2] sm:$0x1]
    %vm173 = vcmask 1046528
    %v174 = vrot.slane %v150, 1
    %v175 = vrot.slane %v155, 1
    %v176 = vsel %vm173, %v174, %v175
    %v177 = vrot.slane %v160, 1
    %v178 = vrot.slane %v165, 1
    %v179 = vsel %vm173, %v177, %v178
    %180 = vrot.lane.b32.xlu0 %v176, 120
    %v181 = vpop.permute.xlu0 %180
    %182 = vrot.lane.b32.xlu0 %v175, 120
    %v183 = vpop.permute.xlu0 %182
    %184 = vrot.lane.b32.xlu0 %v179, 120
    %v185 = vpop.permute.xlu0 %184
    %186 = vrot.lane.b32.xlu0 %v178, 120
    %v187 = vpop.permute.xlu0 %186
    %v192 = vadd.f32 %v150, %v181
    %v193 = vadd.f32 %v155, %v183
    %v194 = vadd.f32 %v160, %v185
    %v195 = vadd.f32 %v165, %v187
    %vm196 = vcmask 1045504
    %v197 = vrot.slane %v150, 2
    %v198 = vrot.slane %v155, 2
    %v199 = vsel %vm196, %v197, %v198
    %v200 = vrot.slane %v160, 2
    %v201 = vrot.slane %v165, 2
    %v202 = vsel %vm196, %v200, %v201
    %203 = vrot.lane.b32.xlu0 %v199, 112
    %v204 = vpop.permute.xlu0 %203
    %205 = vrot.lane.b32.xlu0 %v198, 112
    %v206 = vpop.permute.xlu0 %205
    %207 = vrot.lane.b32.xlu0 %v202, 112
    %v208 = vpop.permute.xlu0 %207
    %209 = vrot.lane.b32.xlu0 %v201, 112
    %v210 = vpop.permute.xlu0 %209
    %v215 = vadd.f32 %v192, %v204
    %v216 = vadd.f32 %v193, %v206
    %v217 = vadd.f32 %v194, %v208
    %v218 = vadd.f32 %v195, %v210
    %vm219 = vcmask 64512
    %v220 = vsel %vm219, %v215, -inf
    %vm221 = vcmask 62464
    %v222 = vsel %vm221, %v216, -inf
    %v223 = vmax.f32 %v220, %v222
    %v224 = vrot.slane %v223, 4
    %v225 = vmax.f32 %v223, %v224
    %v226 = vrot.slane %v225, 2
    %v227 = vmax.f32 %v225, %v226
    %v228 = vrot.slane %v227, 1
    %v229 = vmax.f32 %v227, %v228
    %v230 = vsel %vm219, %v217, -inf
    %v231 = vsel %vm221, %v218, -inf
    %v232 = vmax.f32 %v230, %v231
    %v233 = vrot.slane %v232, 4
    %v234 = vmax.f32 %v232, %v233
    %v235 = vrot.slane %v234, 2
    %v236 = vmax.f32 %v234, %v235
    %v237 = vrot.slane %v236, 1
    %v238 = vmax.f32 %v236, %v237
    %v240 = vlaneseq
    %v241 = vshrl.u32 %v240, 7
    %v242 = vsub.s32 0, %v241
    %v243 = vrot.slane %v168, %v242
    %v245 = vadd.f32 %v229, %v243
    %v246 = vadd.f32 %v238, %v243
    %v247 = vmax.f32 %v245, 0.0
    %v248 = vmax.f32 %v246, 0.0
    %vm249 = vcmask 1044480
    %v250 = vrot.slane %v150, 3
    %v251 = vrot.slane %v155, 3
    %v252 = vsel %vm249, %v250, %v251
    %v253 = vrot.slane %v160, 3
    %v254 = vrot.slane %v165, 3
    %v255 = vsel %vm249, %v253, %v254
    %256 = vrot.lane.b32.xlu0 %v252, 104
    %v257 = vpop.permute.xlu0 %256
    %258 = vrot.lane.b32.xlu0 %v251, 104
    %v259 = vpop.permute.xlu0 %258
    %260 = vrot.lane.b32.xlu0 %v255, 104
    %v261 = vpop.permute.xlu0 %260
    %262 = vrot.lane.b32.xlu0 %v254, 104
    %v263 = vpop.permute.xlu0 %262
    %v268 = vadd.f32 %v215, %v257
    %v269 = vadd.f32 %v216, %v259
    %v270 = vadd.f32 %v217, %v261
    %v271 = vadd.f32 %v218, %v263
    %vm272 = vcmask 261312
    %v273 = vsel %vm272, %v268, -inf
    %vm274 = vcmask 258240
    %v275 = vsel %vm274, %v269, -inf
    %v276 = vmax.f32 %v273, %v275
    %v277 = vrot.slane %v276, 4
    %v278 = vmax.f32 %v276, %v277
    %v279 = vrot.slane %v278, 2
    %v280 = vmax.f32 %v278, %v279
    %v281 = vrot.slane %v280, 1
    %v282 = vmax.f32 %v280, %v281
    %v283 = vsel %vm272, %v270, -inf
    %v284 = vsel %vm274, %v271, -inf
    %v285 = vmax.f32 %v283, %v284
    %v286 = vrot.slane %v285, 4
    %v287 = vmax.f32 %v285, %v286
    %v288 = vrot.slane %v287, 2
    %v289 = vmax.f32 %v287, %v288
    %v290 = vrot.slane %v289, 1
    %v291 = vmax.f32 %v289, %v290
    %292 = vrot.lane.b32.xlu0 %v243, 16
    %v293 = vpop.permute.xlu0 %292
    %v295 = vadd.f32 %v282, %v293
    %v296 = vadd.f32 %v291, %v293
    %v297 = vmax.f32 %v295, 0.0
    %v298 = vmax.f32 %v296, 0.0
    %vm299 = vcmask 1043456
    %v300 = vrot.slane %v150, 4
    %v301 = vrot.slane %v155, 4
    %v302 = vsel %vm299, %v300, %v301
    %v303 = vrot.slane %v160, 4
    %v304 = vrot.slane %v165, 4
    %v305 = vsel %vm299, %v303, %v304
    %306 = vrot.lane.b32.xlu0 %v302, 96
    %v307 = vpop.permute.xlu0 %306
    %308 = vrot.lane.b32.xlu0 %v301, 96
    %v309 = vpop.permute.xlu0 %308
    %310 = vrot.lane.b32.xlu0 %v305, 96
    %v311 = vpop.permute.xlu0 %310
    %312 = vrot.lane.b32.xlu0 %v304, 96
    %v313 = vpop.permute.xlu0 %312
    %v318 = vadd.f32 %v268, %v307
    %v319 = vadd.f32 %v269, %v309
    %v320 = vadd.f32 %v270, %v311
    %v321 = vadd.f32 %v271, %v313
    %vm322 = vcmask 523712
    %v323 = vsel %vm322, %v318, -inf
    %vm324 = vcmask 519616
    %v325 = vsel %vm324, %v319, -inf
    %v326 = vmax.f32 %v323, %v325
    %v327 = vrot.slane %v326, 4
    %v328 = vmax.f32 %v326, %v327
    %v329 = vrot.slane %v328, 2
    %v330 = vmax.f32 %v328, %v329
    %v331 = vrot.slane %v330, 1
    %v332 = vmax.f32 %v330, %v331
    %v333 = vsel %vm322, %v320, -inf
    %v334 = vsel %vm324, %v321, -inf
    %v335 = vmax.f32 %v333, %v334
    %v336 = vrot.slane %v335, 4
    %v337 = vmax.f32 %v335, %v336
    %v338 = vrot.slane %v337, 2
    %v339 = vmax.f32 %v337, %v338
    %v340 = vrot.slane %v339, 1
    %v341 = vmax.f32 %v339, %v340
    %342 = vrot.lane.b32.xlu0 %v243, 40
    %v343 = vpop.permute.xlu0 %342
    %v345 = vadd.f32 %v332, %v343
    %v346 = vadd.f32 %v341, %v343
    %v347 = vmax.f32 %v345, 0.0
    %v348 = vmax.f32 %v346, 0.0
    %v351 = vrot.slane %v248, 7
    %vm352 = vcmask 1041409
    %v353 = vsel %vm352, %v351, %v247
    %v357 = vrot.slane %v298, 7
    %v358 = vsel %vm352, %v357, %v297
    %359 = vrot.lane.b32.xlu0 %v358, 112
    %v360 = vpop.permute.xlu0 %359
    %v364 = vrot.slane %v348, 7
    %v365 = vsel %vm352, %v364, %v347
    %366 = vrot.lane.b32.xlu0 %v365, 88
    %v367 = vpop.permute.xlu0 %366
    %v369 = vsel %vm219, %v353, %v360
    %vm370 = vcmask 130048
    %v371 = vsel %vm370, %v369, %v367
    %v372 = vld [vmem:[#allocation7] sm:$0xff]
    %v373 = vld [vmem:[#allocation7 + $0x8] sm:$0xff]
    %v374 = vld [vmem:[#allocation7 + $0x10] sm:$0xff]
    %v375 = vld [vmem:[%s4] sm:$0x1]
    %v377 = vlaneseq
    %v378 = vshrl.u32 %v377, 7
    %v379 = vsub.s32 0, %v378
    %v380 = vrot.slane %v375, %v379
    %vm382 = vcmask 195584
    %v384 = vsel %vm382, %v371, 0
    %386 = vmatprep.subr.mxu0 0.0
    %387 = vmatpush1.msra.mxu0 0.0
    %388 = vmatprep.subr.mxu0 0.0
    %389 = vmatpush1.msra.mxu0 0.0
    %390 = vmatprep.subr.mxu0 0.0
    %391 = vmatpush1.msra.mxu0 0.0
    %392 = vmatprep.subr.mxu0 0.0
    %393 = vmatpush1.msra.mxu0 0.0
    %394 = vmatprep.subr.mxu0 0.0
    %395 = vmatpush1.msra.mxu0 0.0
    %396 = vmatprep.subr.mxu0 0.0
    %397 = vmatpush1.msra.mxu0 0.0
    %398 = vmatprep.subr.mxu0 0.0
    %399 = vmatpush1.msra.mxu0 0.0
    %400 = vmatprep.subr.mxu0 0.0
    %401 = vmatpush1.msra.mxu0 0.0
    %402 = vmatprep.subr.mxu0 0.0
    %403 = vmatpush1.msra.mxu0 0.0
    %404 = vmatprep.subr.mxu0 0.0
    %405 = vmatpush1.msra.mxu0 0.0
    %406 = vmatprep.subr.mxu0 0.0
    %407 = vmatpush1.msra.mxu0 0.0
    %408 = vmatprep.subr.mxu0 0.0
    %409 = vmatpush1.msra.mxu0 0.0
    %410 = vmatprep.subr.mxu0 0.0
    %411 = vmatpush1.msra.mxu0 0.0
    %412 = vmatprep.subr.mxu0 0.0
    %413 = vmatpush1.msra.mxu0 %v374
    %414 = vmatprep.subr.mxu0 0.0
    %415 = vmatpush1.msra.mxu0 %v373
    %416 = vmatprep.subr.mxu0 0.0
    %417 = vmatpush1.msra.mxu0 %v372
    %418 = vmatprep.subr.mxu0 0.0
    %419 = vmatpush2.msra.mxu0 0.0
    %420 = vmatprep.subr.mxu0 0.0
    %421 = vmatpush2.msra.mxu0 0.0
    %422 = vmatprep.subr.mxu0 0.0
    %423 = vmatpush2.msra.mxu0 0.0
    %424 = vmatprep.subr.mxu0 0.0
    %425 = vmatpush2.msra.mxu0 0.0
    %426 = vmatprep.subr.mxu0 0.0
    %427 = vmatpush2.msra.mxu0 0.0
    %428 = vmatprep.subr.mxu0 0.0
    %429 = vmatpush2.msra.mxu0 0.0
    %430 = vmatprep.subr.mxu0 0.0
    %431 = vmatpush2.msra.mxu0 0.0
    %432 = vmatprep.subr.mxu0 0.0
    %433 = vmatpush2.msra.mxu0 0.0
    %434 = vmatprep.subr.mxu0 0.0
    %435 = vmatpush2.msra.mxu0 0.0
    %436 = vmatprep.subr.mxu0 0.0
    %437 = vmatpush2.msra.mxu0 0.0
    %438 = vmatprep.subr.mxu0 0.0
    %439 = vmatpush2.msra.mxu0 0.0
    %440 = vmatprep.subr.mxu0 0.0
    %441 = vmatpush2.msra.mxu0 0.0
    %442 = vmatprep.subr.mxu0 0.0
    %443 = vmatpush2.msra.mxu0 0.0
    %444 = vmatprep.subr.mxu0 0.0
    %445 = vmatpush2.msra.mxu0 0.0
    %446 = vmatprep.subr.mxu0 0.0
    %447 = vmatpush2.msra.mxu0 0.0
    %448 = vmatprep.subr.mxu0 0.0
    %449 = vmatpush2.msra.mxu0 0.0
    %450 = vmatprep.mubr.f32.mxu0 0.0
    %451 = vmatmul.mubr.f32.gmra.mxu0 %v384
    %v452 = vpop.f32.mrf.mxu0
    %v453 = vadd.f32 %v380, %v452
    %v454 = vpop.f32.mrf.mxu0
    %455 = vdwg.mxu0
    %456 = vst [vmem:[#allocation8] sm:$0x3] %v453
    // Predicated region
    $region34: #{tpu_custom_call.1} parent=1 // pred_check
      _
    $region35: #{tpu_custom_call.1} parent=1 // pred_check_branch
      %458 = sbr.rel (0) target = $region37
    $region36: #{tpu_custom_call.1} parent=1 // pred_region
      %s460 = ssub.s32 32, 32
      %461 = vsyncadd [#allocation4], %s460
      %s463 = sshll.u32 [#allocation8], 4
      %s464 = int_to_ptr.vmem [resolvable:$true] %s463
      %466 = dma.vmem_to_hbm [thread:$0]  %s464, 32, %s5, [#allocation4]
    $region37: #{tpu_custom_call.1} parent=1 // pred_fallthru
      _
    // Predicated region
    $region38: #{tpu_custom_call.1} parent=1 // pred_check
      _
    $region39: #{tpu_custom_call.1} parent=1 // pred_check_branch
      %468 = sbr.rel (0) target = $region41
    $region40: #{tpu_custom_call.1} parent=1 // pred_region
      %469 = dma.done [#allocation4], 32
    $region41: #{tpu_custom_call.1} parent=1 // pred_fallthru
      _
    %470 = vsyncpa [#allocation3], 1
    %471 = vsyncpa [#allocation6], 1
    %472 = vsyncpa [#allocation4], 1

</llo_original>
